<compile_context>
chip_gen: v7x
topology: tpu7x:2x2x1
jax: 0.10.0
libtpu: 0.0.40
codegen_flags: <defaults>
</compile_context>

<pallas_src>
import functools

import jax
import jax.numpy as jnp
from jax.experimental import pallas as pl
from jax.experimental.pallas import tpu as pltpu


# ------------------------------ fused Pallas kernel ----------------------------

def _fm_encoder_fused_kernel(a_hat_ref, x_prot_ref, g1w_ref, g1b_ref, g2w_ref,
                             g2b_ref, m_dp_ref, hgcn_w_ref, xds_ref, embed_ref,
                             a_vs_ref, root1_ref, w1_ref, root2_ref, w2_ref,
                             o_ref, *, num_rel, n_drug):
    bf16 = jnp.bfloat16
    dot = functools.partial(jnp.dot, preferred_element_type=jnp.float32)

    # ---- PPEncoder: GCNConv -> relu -> GCNConv  (A_hat @ (X @ W) + b) ---------
    a_hat = a_hat_ref[...]                                            # bf16
    h = dot(a_hat, dot(x_prot_ref[...], g1w_ref[...]).astype(bf16)) + g1b_ref[...]
    h = jnp.maximum(h, 0.0).astype(bf16)                              # relu (f32 path)
    h = (dot(a_hat, dot(h, g2w_ref[...]).astype(bf16)) + g2b_ref[...]).astype(bf16)

    # ---- MyHierarchyConv: mean agg prot -> drug, then linear ------------------
    x_pd = dot(dot(m_dp_ref[...], h).astype(bf16), hgcn_w_ref[...])   # (n_drug, pd)

    # ---- drug embedding (x_drug already pre-scaled by 1/d_norm in wrapper) ----
    xe = dot(xds_ref[...], embed_ref[...])                            # (n_drug, n_embed)

    # lane-concat [xe | x_pd] -> xcat: fin1 = n_embed + pd_dim lanes (one vreg).
    xcat = jnp.concatenate([xe, x_pd], axis=1).astype(bf16)

    a_vs = a_vs_ref[...]                                              # (R*n, n) bf16

    def rel_sum(x_b, w_stacked_ref):
        # sum_r A_r @ x @ W_r in TWO matmuls:
        #   1) batched aggregation over all relations: (R*n, n) @ (n, F)
        #   2) lane-concat relayout (R*n, F) -> (n, R*F) (static sublane-aligned
        #      slices, XLU work), then one (n, R*F) @ (R*F, H) contraction.
        ax = dot(a_vs, x_b)                                           # (R*n, F) f32
        ax_cat = jnp.concatenate(
            [ax[r * n_drug:(r + 1) * n_drug, :] for r in range(num_rel)],
            axis=1).astype(bf16)                                      # (n, R*F)
        return dot(ax_cat, w_stacked_ref[...])                        # (n, H) f32

    # ---- RGCN layer 1 + relu ---------------------------------------------------
    x1 = rel_sum(xcat, w1_ref) + dot(xcat, root1_ref[...])
    x1 = jnp.maximum(x1, 0.0).astype(bf16)

    # ---- RGCN layer 2 (output columns zero-padded to 128 -> unmasked store) ---
    o_ref[...] = rel_sum(x1, w2_ref) + dot(x1, root2_ref[...])


# ------------------ graph glue (dense aggregation operators) ------------------
# TODO(synk): the sparse edge_index gather/scatter has no clean in-kernel
# equivalent; it is lowered to dense normalized adjacency operators in plain
# JAX.  At realistic graph sizes, replace these O(n^2) dense operators with a
# scalar-prefetch (PrefetchScalarGridSpec) CSR row-gather kernel, tile the
# contraction axes with a real grid (parallel M axis for v7x's 2 TCs), and set
# vmem_limit_bytes explicitly.

def gcn_norm_dense(edge_index, n):
    src, dst = edge_index[0], edge_index[1]
    a = jnp.zeros((n, n), jnp.float32).at[dst, src].add(1.0)
    a = a + jnp.eye(n, dtype=jnp.float32)          # self loops
    deg = a.sum(axis=1)
    dinv = jnp.where(deg > 0, 1.0 / jnp.sqrt(deg), 0.0)
    return dinv[:, None] * a * dinv[None, :]


def mean_agg_dense(edge_index, n):
    src, dst = edge_index[0], edge_index[1]
    c = jnp.zeros((n, n), jnp.float32).at[dst, src].add(1.0)
    deg = c.sum(axis=1)
    return c / jnp.maximum(deg, 1.0)[:, None]


def rel_mean_adj_dense(edge_index, edge_type, num_rel, n):
    src, dst = edge_index[0], edge_index[1]
    c = jnp.zeros((num_rel, n, n), jnp.float32).at[edge_type, dst, src].add(1.0)
    deg = c.sum(axis=(0, 2))                       # total in-degree over relations
    return c / jnp.maximum(deg, 1.0)[None, :, None]


# ------------------------------ forward pass ----------------------------------

def fm_encoder_cat_forward(params, x_drug, dd_edge_index, dd_edge_type, dd_range_list,
                           d_norm, x_prot, pp_edge_index, dp_edge_index, dp_range_list,
                           *, uni_num_prot, uni_num_drug, num_dd_et):
    bf16 = jnp.bfloat16
    num_prot, in_dim_prot = x_prot.shape
    in_dim_drug = x_drug.shape[1]
    n_embed = params['embed'].shape[1]
    prot_drug_dim = params['hgcn_w'].shape[1]
    pp_hid1 = params['gcn1_w'].shape[1]
    pp_hid2 = params['gcn2_w'].shape[1]
    n_hid1 = params['basis1'].shape[2]
    n_hid2 = params['basis2'].shape[2]
    fin1 = n_embed + prot_drug_dim

    # dense normalized aggregation operators (plain-JAX glue), bf16 MXU operands
    a_hat = gcn_norm_dense(pp_edge_index, num_prot).astype(bf16)
    n_tot = uni_num_prot + uni_num_drug
    m_dp = mean_agg_dense(dp_edge_index, n_tot)[uni_num_prot:, :uni_num_prot].astype(bf16)
    a_rel = rel_mean_adj_dense(dd_edge_index, dd_edge_type, num_dd_et, uni_num_drug)
    a_vs = a_rel.reshape(num_dd_et * uni_num_drug, uni_num_drug).astype(bf16)

    # RGCN basis-decomposition weights in plain JAX (tiny; XLA fuses it for free)
    nb = params['basis1'].shape[0]
    w1 = (params['att1'] @ params['basis1'].reshape(nb, -1)).reshape(num_dd_et, fin1, n_hid1)
    w2 = (params['att2'] @ params['basis2'].reshape(nb, -1)).reshape(num_dd_et, n_hid1, n_hid2)
    w1_vs = w1.reshape(num_dd_et * fin1, n_hid1).astype(bf16)          # row-stacked W1_r

    # lane-dense output: pad the last layer's output columns to a multiple of 128
    out_pad = max(128, ((n_hid2 + 127) // 128) * 128)
    pad = out_pad - n_hid2
    w2_vs = jnp.pad(w2, ((0, 0), (0, 0), (0, pad))).reshape(
        num_dd_et * n_hid1, out_pad).astype(bf16)
    root2_pad = jnp.pad(params['root2'], ((0, 0), (0, pad))).astype(bf16)

    # fold the per-row 1/d_norm scaling into x_drug (commutes with @ embed)
    x_drug_scaled = (x_drug / d_norm[:, None]).astype(bf16)

    args = (a_hat, x_prot.astype(bf16), params['gcn1_w'].astype(bf16), params['gcn1_b'],
            params['gcn2_w'].astype(bf16), params['gcn2_b'], m_dp,
            params['hgcn_w'].astype(bf16), x_drug_scaled, params['embed'].astype(bf16),
            a_vs, params['root1'].astype(bf16), w1_vs, root2_pad, w2_vs)

    # advisory cost estimate (helps XLA overlap the scatter-add glue)
    flops = 2 * (num_prot * in_dim_prot * pp_hid1 + num_prot * num_prot * pp_hid1
                 + num_prot * pp_hid1 * pp_hid2 + num_prot * num_prot * pp_hid2
                 + uni_num_drug * num_prot * pp_hid2
                 + uni_num_drug * pp_hid2 * prot_drug_dim
                 + uni_num_drug * in_dim_drug * n_embed
                 + num_dd_et * uni_num_drug * uni_num_drug * fin1
                 + uni_num_drug * num_dd_et * fin1 * n_hid1
                 + uni_num_drug * fin1 * n_hid1
                 + num_dd_et * uni_num_drug * uni_num_drug * n_hid1
                 + uni_num_drug * num_dd_et * n_hid1 * out_pad
                 + uni_num_drug * n_hid1 * out_pad)
    bytes_accessed = int(sum(a.size * a.dtype.itemsize for a in args)
                         + uni_num_drug * out_pad * 4)

    kernel = functools.partial(_fm_encoder_fused_kernel,
                               num_rel=num_dd_et, n_drug=uni_num_drug)

    # grid-less call: whole arrays resident in VMEM, no double-buffering.
    vmem_spec = pl.BlockSpec(memory_space=pltpu.MemorySpace.VMEM)
    out_padded = pl.pallas_call(
        kernel,
        out_shape=jax.ShapeDtypeStruct((uni_num_drug, out_pad), jnp.float32),
        in_specs=[vmem_spec] * len(args),
        out_specs=vmem_spec,
        cost_estimate=pl.CostEstimate(flops=flops, transcendentals=0,
                                      bytes_accessed=bytes_accessed),
    )(*args)
    return out_padded[:, :n_hid2]


# ----------------------------- pure-JAX reference ------------------------------

def ref_forward(params, x_drug, dd_edge_index, dd_edge_type, dd_range_list,
                d_norm, x_prot, pp_edge_index, dp_edge_index, dp_range_list,
                *, uni_num_prot, uni_num_drug, num_dd_et):
    mm = lambda a, b: jnp.matmul(a, b, precision=jax.lax.Precision.HIGHEST)
    num_prot = x_prot.shape[0]
    a_hat = gcn_norm_dense(pp_edge_index, num_prot)
    h = jnp.maximum(mm(a_hat, mm(x_prot, params['gcn1_w'])) + params['gcn1_b'], 0.0)
    h = mm(a_hat, mm(h, params['gcn2_w'])) + params['gcn2_b']
    x_cat = jnp.concatenate(
        [h, jnp.zeros((uni_num_drug, h.shape[1]), h.dtype)], axis=0)
    m_drug = mean_agg_dense(dp_edge_index, uni_num_prot + uni_num_drug)[uni_num_prot:, :]
    x_pd = mm(mm(m_drug, x_cat), params['hgcn_w'])
    xd = mm(x_drug, params['embed']) / d_norm[:, None]
    xd = jnp.concatenate([xd, x_pd], axis=1)
    a_rel = rel_mean_adj_dense(dd_edge_index, dd_edge_type, num_dd_et, uni_num_drug)
    for att, basis, root, relu in ((params['att1'], params['basis1'], params['root1'], True),
                                   (params['att2'], params['basis2'], params['root2'], False)):
        r, b = att.shape
        fin, fout = basis.shape[1], basis.shape[2]
        w = mm(att, basis.reshape(b, -1)).reshape(r, fin, fout)
        agg = sum(mm(a_rel[et], mm(xd, w[et])) for et in range(r))
        xd = agg + mm(xd, root)
        if relu:
            xd = jnp.maximum(xd, 0.0)
    return xd


# ----------------------------------- main --------------------------------------

if __name__ == "__main__":
    key = jax.random.PRNGKey(0)
    keys = jax.random.split(key, 20)

    # sizes (small, consistent with the module)
    num_prot, uni_num_prot = 24, 24
    num_drug, uni_num_drug = 16, 16
    in_dim_prot, in_dim_drug = 8, 12
    num_dd_et, num_base = 3, 4
    n_embed, n_hid1, n_hid2 = 48, 32, 16
    prot_drug_dim = 16
    pp_hid1, pp_hid2 = 32, 16

    # graphs
    n_pp_edges = 40
    pp_edge_index = jnp.stack([
        jax.random.randint(keys[0], (n_pp_edges,), 0, num_prot),
        jax.random.randint(keys[1], (n_pp_edges,), 0, num_prot)])
    n_dp_edges = 30
    dp_edge_index = jnp.stack([
        jax.random.randint(keys[2], (n_dp_edges,), 0, num_prot),
        jax.random.randint(keys[3], (n_dp_edges,), 0, uni_num_drug) + uni_num_prot])
    dp_range_list = jnp.array([[0, n_dp_edges]], dtype=jnp.int32)
    edges_per_et = 10
    dd_edge_index = jnp.stack([
        jax.random.randint(keys[4], (num_dd_et * edges_per_et,), 0, num_drug),
        jax.random.randint(keys[5], (num_dd_et * edges_per_et,), 0, num_drug)])
    dd_edge_type = jnp.repeat(jnp.arange(num_dd_et), edges_per_et)
    dd_range_list = jnp.stack([jnp.arange(num_dd_et) * edges_per_et,
                               (jnp.arange(num_dd_et) + 1) * edges_per_et], axis=1)

    # features
    x_prot = jax.random.normal(keys[6], (num_prot, in_dim_prot), jnp.float32)
    x_drug = jax.random.normal(keys[7], (num_drug, in_dim_drug), jnp.float32)
    d_norm = jax.random.uniform(keys[8], (num_drug,), jnp.float32, 1.0, 2.0)

    # deterministic parameters (shapes per __init__; init stds per reset_parameters)
    fin1 = n_embed + prot_drug_dim
    params = dict(
        gcn1_w=jax.random.normal(keys[9], (in_dim_prot, pp_hid1)) / jnp.sqrt(in_dim_prot),
        gcn1_b=jnp.zeros((1, pp_hid1), jnp.float32),
        gcn2_w=jax.random.normal(keys[10], (pp_hid1, pp_hid2)) / jnp.sqrt(pp_hid1),
        gcn2_b=jnp.zeros((1, pp_hid2), jnp.float32),
        hgcn_w=jax.random.normal(keys[11], (pp_hid2, prot_drug_dim)) / jnp.sqrt(pp_hid2),
        embed=jax.random.normal(keys[12], (in_dim_drug, n_embed)),
        att1=jax.random.normal(keys[13], (num_dd_et, num_base)) / jnp.sqrt(num_base),
        basis1=jax.random.normal(keys[14], (num_base, fin1, n_hid1)) / jnp.sqrt(fin1),
        root1=jax.random.normal(keys[15], (fin1, n_hid1)) / jnp.sqrt(fin1),
        att2=jax.random.normal(keys[16], (num_dd_et, num_base)) / jnp.sqrt(num_base),
        basis2=jax.random.normal(keys[17], (num_base, n_hid1, n_hid2)) * (2.0 / n_hid1),
        root2=jax.random.normal(keys[18], (n_hid1, n_hid2)) * (2.0 / n_hid1),
    )

    out = fm_encoder_cat_forward(
        params, x_drug, dd_edge_index, dd_edge_type, dd_range_list, d_norm,
        x_prot, pp_edge_index, dp_edge_index, dp_range_list,
        uni_num_prot=uni_num_prot, uni_num_drug=uni_num_drug, num_dd_et=num_dd_et)
    out = jax.block_until_ready(out)

    ref = ref_forward(
        params, x_drug, dd_edge_index, dd_edge_type, dd_range_list, d_norm,
        x_prot, pp_edge_index, dp_edge_index, dp_range_list,
        uni_num_prot=uni_num_prot, uni_num_drug=uni_num_drug, num_dd_et=num_dd_et)
    ref = jax.block_until_ready(ref)

    assert out.shape == (uni_num_drug, n_hid2), out.shape
    assert bool(jnp.all(jnp.isfinite(out)))
    # bf16 MXU operands (f32 accumulation) vs f32 HIGHEST-precision reference:
    rel_err = float(jnp.linalg.norm(out - ref) / jnp.linalg.norm(ref))
    assert rel_err < 5e-2, rel_err
    assert bool(jnp.allclose(out, ref, atol=1e-1, rtol=1e-1))
    print("KERNEL_OK")
</pallas_src>

<mosaic_0001>
module attributes {stable_mosaic.version = 11 : i64} {
  func.func @_fm_encoder_fused_kernel(%arg0: memref<24x24xbf16, #tpu.memory_space<vmem>>, %arg1: memref<24x8xbf16, #tpu.memory_space<vmem>>, %arg2: memref<8x32xbf16, #tpu.memory_space<vmem>>, %arg3: memref<1x32xf32, #tpu.memory_space<vmem>>, %arg4: memref<32x16xbf16, #tpu.memory_space<vmem>>, %arg5: memref<1x16xf32, #tpu.memory_space<vmem>>, %arg6: memref<16x24xbf16, #tpu.memory_space<vmem>>, %arg7: memref<16x16xbf16, #tpu.memory_space<vmem>>, %arg8: memref<16x12xbf16, #tpu.memory_space<vmem>>, %arg9: memref<12x48xbf16, #tpu.memory_space<vmem>>, %arg10: memref<48x16xbf16, #tpu.memory_space<vmem>>, %arg11: memref<64x32xbf16, #tpu.memory_space<vmem>>, %arg12: memref<192x32xbf16, #tpu.memory_space<vmem>>, %arg13: memref<32x128xbf16, #tpu.memory_space<vmem>>, %arg14: memref<96x128xbf16, #tpu.memory_space<vmem>>, %arg15: memref<16x128xf32, #tpu.memory_space<vmem>>) attributes {dimension_semantics = [], scalar_prefetch = 0 : i64, scratch_operands = 0 : i64, tpu.core_type = #tpu.core_type<tc>} {
    %c0 = arith.constant 0 : index
    %c0_0 = arith.constant 0 : index
    %0 = vector.load %arg0[%c0, %c0_0] : memref<24x24xbf16, #tpu.memory_space<vmem>>, vector<24x24xbf16>
    %c0_1 = arith.constant 0 : index
    %c0_2 = arith.constant 0 : index
    %1 = vector.load %arg1[%c0_1, %c0_2] : memref<24x8xbf16, #tpu.memory_space<vmem>>, vector<24x8xbf16>
    %c0_3 = arith.constant 0 : index
    %c0_4 = arith.constant 0 : index
    %2 = vector.load %arg2[%c0_3, %c0_4] : memref<8x32xbf16, #tpu.memory_space<vmem>>, vector<8x32xbf16>
    %cst = arith.constant dense<0.000000e+00> : vector<24x32xf32>
    %3 = tpu.matmul %1, %2, %cst {dimension_numbers = #tpu.dot_dimension_numbers<[1], [0], [0], [1], [0, 0, 1, 1], [], []>} : vector<24x8xbf16>, vector<8x32xbf16>, vector<24x32xf32> -> vector<24x32xf32>
    %4 = arith.truncf %3 : vector<24x32xf32> to vector<24x32xbf16>
    %cst_5 = arith.constant dense<0.000000e+00> : vector<24x32xf32>
    %5 = tpu.matmul %0, %4, %cst_5 {dimension_numbers = #tpu.dot_dimension_numbers<[1], [0], [0], [1], [0, 0, 1, 1], [], []>} : vector<24x24xbf16>, vector<24x32xbf16>, vector<24x32xf32> -> vector<24x32xf32>
    %c0_6 = arith.constant 0 : index
    %c0_7 = arith.constant 0 : index
    %6 = vector.load %arg3[%c0_6, %c0_7] : memref<1x32xf32, #tpu.memory_space<vmem>>, vector<1x32xf32>
    %7 = vector.broadcast %6 : vector<1x32xf32> to vector<24x32xf32>
    %8 = arith.addf %5, %7 : vector<24x32xf32>
    %cst_8 = arith.constant 0.000000e+00 : f32
    %9 = vector.broadcast %cst_8 : f32 to vector<24x32xf32>
    %10 = arith.maximumf %8, %9 : vector<24x32xf32>
    %11 = arith.truncf %10 : vector<24x32xf32> to vector<24x32xbf16>
    %c0_9 = arith.constant 0 : index
    %c0_10 = arith.constant 0 : index
    %12 = vector.load %arg4[%c0_9, %c0_10] : memref<32x16xbf16, #tpu.memory_space<vmem>>, vector<32x16xbf16>
    %cst_11 = arith.constant dense<0.000000e+00> : vector<24x16xf32>
    %13 = tpu.matmul %11, %12, %cst_11 {dimension_numbers = #tpu.dot_dimension_numbers<[1], [0], [0], [1], [0, 0, 1, 1], [], []>} : vector<24x32xbf16>, vector<32x16xbf16>, vector<24x16xf32> -> vector<24x16xf32>
    %14 = arith.truncf %13 : vector<24x16xf32> to vector<24x16xbf16>
    %cst_12 = arith.constant dense<0.000000e+00> : vector<24x16xf32>
    %15 = tpu.matmul %0, %14, %cst_12 {dimension_numbers = #tpu.dot_dimension_numbers<[1], [0], [0], [1], [0, 0, 1, 1], [], []>} : vector<24x24xbf16>, vector<24x16xbf16>, vector<24x16xf32> -> vector<24x16xf32>
    %c0_13 = arith.constant 0 : index
    %c0_14 = arith.constant 0 : index
    %16 = vector.load %arg5[%c0_13, %c0_14] : memref<1x16xf32, #tpu.memory_space<vmem>>, vector<1x16xf32>
    %17 = vector.broadcast %16 : vector<1x16xf32> to vector<24x16xf32>
    %18 = arith.addf %15, %17 : vector<24x16xf32>
    %19 = arith.truncf %18 : vector<24x16xf32> to vector<24x16xbf16>
    %c0_15 = arith.constant 0 : index
    %c0_16 = arith.constant 0 : index
    %20 = vector.load %arg6[%c0_15, %c0_16] : memref<16x24xbf16, #tpu.memory_space<vmem>>, vector<16x24xbf16>
    %cst_17 = arith.constant dense<0.000000e+00> : vector<16x16xf32>
    %21 = tpu.matmul %20, %19, %cst_17 {dimension_numbers = #tpu.dot_dimension_numbers<[1], [0], [0], [1], [0, 0, 1, 1], [], []>} : vector<16x24xbf16>, vector<24x16xbf16>, vector<16x16xf32> -> vector<16x16xf32>
    %22 = arith.truncf %21 : vector<16x16xf32> to vector<16x16xbf16>
    %c0_18 = arith.constant 0 : index
    %c0_19 = arith.constant 0 : index
    %23 = vector.load %arg7[%c0_18, %c0_19] : memref<16x16xbf16, #tpu.memory_space<vmem>>, vector<16x16xbf16>
    %cst_20 = arith.constant dense<0.000000e+00> : vector<16x16xf32>
    %24 = tpu.matmul %22, %23, %cst_20 {dimension_numbers = #tpu.dot_dimension_numbers<[1], [0], [0], [1], [0, 0, 1, 1], [], []>} : vector<16x16xbf16>, vector<16x16xbf16>, vector<16x16xf32> -> vector<16x16xf32>
    %c0_21 = arith.constant 0 : index
    %c0_22 = arith.constant 0 : index
    %25 = vector.load %arg8[%c0_21, %c0_22] : memref<16x12xbf16, #tpu.memory_space<vmem>>, vector<16x12xbf16>
    %c0_23 = arith.constant 0 : index
    %c0_24 = arith.constant 0 : index
    %26 = vector.load %arg9[%c0_23, %c0_24] : memref<12x48xbf16, #tpu.memory_space<vmem>>, vector<12x48xbf16>
    %cst_25 = arith.constant dense<0.000000e+00> : vector<16x48xf32>
    %27 = tpu.matmul %25, %26, %cst_25 {dimension_numbers = #tpu.dot_dimension_numbers<[1], [0], [0], [1], [0, 0, 1, 1], [], []>} : vector<16x12xbf16>, vector<12x48xbf16>, vector<16x48xf32> -> vector<16x48xf32>
    %28 = tpu.concatenate %27, %24 in 1 : vector<16x48xf32>, vector<16x16xf32> -> vector<16x64xf32>
    %29 = arith.truncf %28 : vector<16x64xf32> to vector<16x64xbf16>
    %c0_26 = arith.constant 0 : index
    %c0_27 = arith.constant 0 : index
    %30 = vector.load %arg10[%c0_26, %c0_27] : memref<48x16xbf16, #tpu.memory_space<vmem>>, vector<48x16xbf16>
    %cst_28 = arith.constant dense<0.000000e+00> : vector<48x64xf32>
    %31 = tpu.matmul %30, %29, %cst_28 {dimension_numbers = #tpu.dot_dimension_numbers<[1], [0], [0], [1], [0, 0, 1, 1], [], []>} : vector<48x16xbf16>, vector<16x64xbf16>, vector<48x64xf32> -> vector<48x64xf32>
    %32 = vector.extract_strided_slice %31 {offsets = [0, 0], sizes = [16, 64], strides = [1, 1]} : vector<48x64xf32> to vector<16x64xf32>
    %33 = vector.extract_strided_slice %31 {offsets = [16, 0], sizes = [16, 64], strides = [1, 1]} : vector<48x64xf32> to vector<16x64xf32>
    %34 = vector.extract_strided_slice %31 {offsets = [32, 0], sizes = [16, 64], strides = [1, 1]} : vector<48x64xf32> to vector<16x64xf32>
    %35 = tpu.concatenate %32, %33, %34 in 1 : vector<16x64xf32>, vector<16x64xf32>, vector<16x64xf32> -> vector<16x192xf32>
    %36 = arith.truncf %35 : vector<16x192xf32> to vector<16x192xbf16>
    %c0_29 = arith.constant 0 : index
    %c0_30 = arith.constant 0 : index
    %37 = vector.load %arg12[%c0_29, %c0_30] : memref<192x32xbf16, #tpu.memory_space<vmem>>, vector<192x32xbf16>
    %cst_31 = arith.constant dense<0.000000e+00> : vector<16x32xf32>
    %38 = tpu.matmul %36, %37, %cst_31 {dimension_numbers = #tpu.dot_dimension_numbers<[1], [0], [0], [1], [0, 0, 1, 1], [], []>} : vector<16x192xbf16>, vector<192x32xbf16>, vector<16x32xf32> -> vector<16x32xf32>
    %c0_32 = arith.constant 0 : index
    %c0_33 = arith.constant 0 : index
    %39 = vector.load %arg11[%c0_32, %c0_33] : memref<64x32xbf16, #tpu.memory_space<vmem>>, vector<64x32xbf16>
    %cst_34 = arith.constant dense<0.000000e+00> : vector<16x32xf32>
    %40 = tpu.matmul %29, %39, %cst_34 {dimension_numbers = #tpu.dot_dimension_numbers<[1], [0], [0], [1], [0, 0, 1, 1], [], []>} : vector<16x64xbf16>, vector<64x32xbf16>, vector<16x32xf32> -> vector<16x32xf32>
    %41 = arith.addf %38, %40 : vector<16x32xf32>
    %cst_35 = arith.constant 0.000000e+00 : f32
    %42 = vector.broadcast %cst_35 : f32 to vector<16x32xf32>
    %43 = arith.maximumf %41, %42 : vector<16x32xf32>
    %44 = arith.truncf %43 : vector<16x32xf32> to vector<16x32xbf16>
    %cst_36 = arith.constant dense<0.000000e+00> : vector<48x32xf32>
    %45 = tpu.matmul %30, %44, %cst_36 {dimension_numbers = #tpu.dot_dimension_numbers<[1], [0], [0], [1], [0, 0, 1, 1], [], []>} : vector<48x16xbf16>, vector<16x32xbf16>, vector<48x32xf32> -> vector<48x32xf32>
    %46 = vector.extract_strided_slice %45 {offsets = [0, 0], sizes = [16, 32], strides = [1, 1]} : vector<48x32xf32> to vector<16x32xf32>
    %47 = vector.extract_strided_slice %45 {offsets = [16, 0], sizes = [16, 32], strides = [1, 1]} : vector<48x32xf32> to vector<16x32xf32>
    %48 = vector.extract_strided_slice %45 {offsets = [32, 0], sizes = [16, 32], strides = [1, 1]} : vector<48x32xf32> to vector<16x32xf32>
    %49 = tpu.concatenate %46, %47, %48 in 1 : vector<16x32xf32>, vector<16x32xf32>, vector<16x32xf32> -> vector<16x96xf32>
    %50 = arith.truncf %49 : vector<16x96xf32> to vector<16x96xbf16>
    %c0_37 = arith.constant 0 : index
    %c0_38 = arith.constant 0 : index
    %51 = vector.load %arg14[%c0_37, %c0_38] : memref<96x128xbf16, #tpu.memory_space<vmem>>, vector<96x128xbf16>
    %cst_39 = arith.constant dense<0.000000e+00> : vector<16x128xf32>
    %52 = tpu.matmul %50, %51, %cst_39 {dimension_numbers = #tpu.dot_dimension_numbers<[1], [0], [0], [1], [0, 0, 1, 1], [], []>} : vector<16x96xbf16>, vector<96x128xbf16>, vector<16x128xf32> -> vector<16x128xf32>
    %c0_40 = arith.constant 0 : index
    %c0_41 = arith.constant 0 : index
    %53 = vector.load %arg13[%c0_40, %c0_41] : memref<32x128xbf16, #tpu.memory_space<vmem>>, vector<32x128xbf16>
    %cst_42 = arith.constant dense<0.000000e+00> : vector<16x128xf32>
    %54 = tpu.matmul %44, %53, %cst_42 {dimension_numbers = #tpu.dot_dimension_numbers<[1], [0], [0], [1], [0, 0, 1, 1], [], []>} : vector<16x32xbf16>, vector<32x128xbf16>, vector<16x128xf32> -> vector<16x128xf32>
    %55 = arith.addf %52, %54 : vector<16x128xf32>
    %c0_43 = arith.constant 0 : index
    %c0_44 = arith.constant 0 : index
    %56 = vector.load %arg15[%c0_43, %c0_44] : memref<16x128xf32, #tpu.memory_space<vmem>>, vector<16x128xf32>
    tpu.vector_store %arg15[%c0_43, %c0_44], %55 {strides = array<i32>} : memref<16x128xf32, #tpu.memory_space<vmem>>, vector<16x128xf32>,
    return
  }
}

</mosaic_0001>

<llo_original>
// kernel: tpu_custom_call.1
$region0: #{tpu_custom_call.1}
  #allocation0 [shape = 'u32[]', space=smem, size = 0x4, offset = 0x4, fixed_abs, tag = 'smem constant byte address 0x4 - core index']
  #allocation1 [shape = 'u32[144,128]{1,0:T(1,128)}', space=vmem, size = 0x12000, scoped, tag = 'internal scratch']
  %s0 = inlined_call_operand.vmem [shape: bf16[24,24], index: 0, kind: input, shape index: {}]
  %s1 = inlined_call_operand.vmem [shape: bf16[24,8], index: 1, kind: input, shape index: {}]
  %s2 = inlined_call_operand.vmem [shape: bf16[8,32], index: 2, kind: input, shape index: {}]
  %s3 = inlined_call_operand.vmem [shape: f32[1,32], index: 3, kind: input, shape index: {}]
  %s4 = inlined_call_operand.vmem [shape: bf16[32,16], index: 4, kind: input, shape index: {}]
  %s5 = inlined_call_operand.vmem [shape: f32[1,16], index: 5, kind: input, shape index: {}]
  %s6 = inlined_call_operand.vmem [shape: bf16[16,24], index: 6, kind: input, shape index: {}]
  %s7 = inlined_call_operand.vmem [shape: bf16[16,16], index: 7, kind: input, shape index: {}]
  %s8 = inlined_call_operand.vmem [shape: bf16[16,12], index: 8, kind: input, shape index: {}]
  %s9 = inlined_call_operand.vmem [shape: bf16[12,48], index: 9, kind: input, shape index: {}]
  %s10 = inlined_call_operand.vmem [shape: bf16[48,16], index: 10, kind: input, shape index: {}]
  %s11 = inlined_call_operand.vmem [shape: bf16[64,32], index: 11, kind: input, shape index: {}]
  %s12 = inlined_call_operand.vmem [shape: bf16[192,32], index: 12, kind: input, shape index: {}]
  %s13 = inlined_call_operand.vmem [shape: bf16[32,128], index: 13, kind: input, shape index: {}]
  %s14 = inlined_call_operand.vmem [shape: bf16[96,128], index: 14, kind: input, shape index: {}]
  %s15 = inlined_call_operand.hbm [shape: f32[16,128], index: 15, kind: output, shape index: {}]
  %s16 = sld [smem:[#allocation0]]
  $region70: #{tpu_custom_call.1} parent=0
    _
  %s18 = ssub.s32 1, %s16
  %s19 = scalar_select 0, %s18, %s16
  $region1: #{tpu_custom_call.1} parent=0
    #allocation2 [shape = 'u8[8192]{0}', space=vmem, size = 0x2000, scoped, tag = 'output window, operand 0, single buffered']
    #allocation3 [shape = 's32[1]{0}', space=sflag, size = 0x4, scoped, tag = 'scoped memory for tpu_custom_call.1']
    %20 = vsyncpa [#allocation3], 0
    // Predicated region
    $region2: #{tpu_custom_call.1} parent=1 // pred_check
      _
    $region3: #{tpu_custom_call.1} parent=1 // pred_check_branch
      %22 = sbr.rel (0) target = $region5
    $region4: #{tpu_custom_call.1} parent=1 // pred_region
      _
    $region5: #{tpu_custom_call.1} parent=1 // pred_fallthru
      _
    // Predicated region
    $region6: #{tpu_custom_call.1} parent=1 // pred_check
      _
    $region7: #{tpu_custom_call.1} parent=1 // pred_check_branch
      %24 = sbr.rel (0) target = $region9
    $region8: #{tpu_custom_call.1} parent=1 // pred_region
      _
    $region9: #{tpu_custom_call.1} parent=1 // pred_fallthru
      _
    // Predicated region
    $region10: #{tpu_custom_call.1} parent=1 // pred_check
      _
    $region11: #{tpu_custom_call.1} parent=1 // pred_check_branch
      %26 = sbr.rel (0) target = $region13
    $region12: #{tpu_custom_call.1} parent=1 // pred_region
      _
    $region13: #{tpu_custom_call.1} parent=1 // pred_fallthru
      _
    // Predicated region
    $region14: #{tpu_custom_call.1} parent=1 // pred_check
      _
    $region15: #{tpu_custom_call.1} parent=1 // pred_check_branch
      %28 = sbr.rel (0) target = $region17
    $region16: #{tpu_custom_call.1} parent=1 // pred_region
      _
    $region17: #{tpu_custom_call.1} parent=1 // pred_fallthru
      _
    // Predicated region
    $region18: #{tpu_custom_call.1} parent=1 // pred_check
      _
    $region19: #{tpu_custom_call.1} parent=1 // pred_check_branch
      %30 = sbr.rel (0) target = $region21
    $region20: #{tpu_custom_call.1} parent=1 // pred_region
      _
    $region21: #{tpu_custom_call.1} parent=1 // pred_fallthru
      _
    // Predicated region
    $region22: #{tpu_custom_call.1} parent=1 // pred_check
      _
    $region23: #{tpu_custom_call.1} parent=1 // pred_check_branch
      %32 = sbr.rel (0) target = $region25
    $region24: #{tpu_custom_call.1} parent=1 // pred_region
      _
    $region25: #{tpu_custom_call.1} parent=1 // pred_fallthru
      _
    // Predicated region
    $region26: #{tpu_custom_call.1} parent=1 // pred_check
      _
    $region27: #{tpu_custom_call.1} parent=1 // pred_check_branch
      %34 = sbr.rel (0) target = $region29
    $region28: #{tpu_custom_call.1} parent=1 // pred_region
      _
    $region29: #{tpu_custom_call.1} parent=1 // pred_fallthru
      _
    // Predicated region
    $region30: #{tpu_custom_call.1} parent=1 // pred_check
      _
    $region31: #{tpu_custom_call.1} parent=1 // pred_check_branch
      %36 = sbr.rel (0) target = $region33
    $region32: #{tpu_custom_call.1} parent=1 // pred_region
      _
    $region33: #{tpu_custom_call.1} parent=1 // pred_fallthru
      _
    // Predicated region
    $region34: #{tpu_custom_call.1} parent=1 // pred_check
      _
    $region35: #{tpu_custom_call.1} parent=1 // pred_check_branch
      %38 = sbr.rel (0) target = $region37
    $region36: #{tpu_custom_call.1} parent=1 // pred_region
      _
    $region37: #{tpu_custom_call.1} parent=1 // pred_fallthru
      _
    // Predicated region
    $region38: #{tpu_custom_call.1} parent=1 // pred_check
      _
    $region39: #{tpu_custom_call.1} parent=1 // pred_check_branch
      %40 = sbr.rel (0) target = $region41
    $region40: #{tpu_custom_call.1} parent=1 // pred_region
      _
    $region41: #{tpu_custom_call.1} parent=1 // pred_fallthru
      _
    // Predicated region
    $region42: #{tpu_custom_call.1} parent=1 // pred_check
      _
    $region43: #{tpu_custom_call.1} parent=1 // pred_check_branch
      %42 = sbr.rel (0) target = $region45
    $region44: #{tpu_custom_call.1} parent=1 // pred_region
      _
    $region45: #{tpu_custom_call.1} parent=1 // pred_fallthru
      _
    // Predicated region
    $region46: #{tpu_custom_call.1} parent=1 // pred_check
      _
    $region47: #{tpu_custom_call.1} parent=1 // pred_check_branch
      %44 = sbr.rel (0) target = $region49
    $region48: #{tpu_custom_call.1} parent=1 // pred_region
      _
    $region49: #{tpu_custom_call.1} parent=1 // pred_fallthru
      _
    // Predicated region
    $region50: #{tpu_custom_call.1} parent=1 // pred_check
      _
    $region51: #{tpu_custom_call.1} parent=1 // pred_check_branch
      %46 = sbr.rel (0) target = $region53
    $region52: #{tpu_custom_call.1} parent=1 // pred_region
      _
    $region53: #{tpu_custom_call.1} parent=1 // pred_fallthru
      _
    // Predicated region
    $region54: #{tpu_custom_call.1} parent=1 // pred_check
      _
    $region55: #{tpu_custom_call.1} parent=1 // pred_check_branch
      %48 = sbr.rel (0) target = $region57
    $region56: #{tpu_custom_call.1} parent=1 // pred_region
      _
    $region57: #{tpu_custom_call.1} parent=1 // pred_fallthru
      _
    // Predicated region
    $region58: #{tpu_custom_call.1} parent=1 // pred_check
      _
    $region59: #{tpu_custom_call.1} parent=1 // pred_check_branch
      %50 = sbr.rel (0) target = $region61
    $region60: #{tpu_custom_call.1} parent=1 // pred_region
      _
    $region61: #{tpu_custom_call.1} parent=1 // pred_fallthru
      _
    %v52 = vld [vmem:[%s0] sm:$0xf]
    %v53 = vld [vmem:[%s0 + $0x4] sm:$0xf]
    %v54 = vld [vmem:[%s0 + $0x8] sm:$0xf]
    %v55 = vld [vmem:[%s1] sm:$0xf]
    %v56 = vld [vmem:[%s1 + $0x4] sm:$0xf]
    %v57 = vld [vmem:[%s1 + $0x8] sm:$0xf]
    %v58 = vld [vmem:[%s2] sm:$0xf]
    %v62 = vunpack.c.l.b16 %v55
    %v63 = vunpack.c.l.b16 %v56
    %v64 = vunpack.c.l.b16 %v57
    %v65 = vpack.c.b16 %v63, %v62
    %v66 = vpack.c.b16 %v64, %v64
    %vm67 = vcmask 64512
    %v69 = vsel %vm67, %v65, 0
    %v72 = vsel %vm67, %v66, 0
    %vm74 = vcmask 1043456
    %v76 = vsel %vm74, %v58, 0
    %78 = vmatprep.subr.bf16.mxu0 0
    %79 = vmatpush1.bf16.msra.mxu0 %v76
    %80 = vmatprep.subr.bf16.mxu0 0
    %81 = vmatpush1.bf16.msra.mxu0 0
    %82 = vmatprep.subr.bf16.mxu0 0
    %83 = vmatpush1.bf16.msra.mxu0 0
    %84 = vmatprep.subr.bf16.mxu0 0
    %85 = vmatpush1.bf16.msra.mxu0 0
    %86 = vmatprep.subr.bf16.mxu0 0
    %87 = vmatpush1.bf16.msra.mxu0 0
    %88 = vmatprep.subr.bf16.mxu0 0
    %89 = vmatpush1.bf16.msra.mxu0 0
    %90 = vmatprep.subr.bf16.mxu0 0
    %91 = vmatpush1.bf16.msra.mxu0 0
    %92 = vmatprep.subr.bf16.mxu0 0
    %93 = vmatpush1.bf16.msra.mxu0 0
    %94 = vmatprep.subr.bf16.mxu0 0
    %95 = vmatpush1.bf16.msra.mxu0 0
    %96 = vmatprep.subr.bf16.mxu0 0
    %97 = vmatpush1.bf16.msra.mxu0 0
    %98 = vmatprep.subr.bf16.mxu0 0
    %99 = vmatpush1.bf16.msra.mxu0 0
    %100 = vmatprep.subr.bf16.mxu0 0
    %101 = vmatpush1.bf16.msra.mxu0 0
    %102 = vmatprep.subr.bf16.mxu0 0
    %103 = vmatpush1.bf16.msra.mxu0 0
    %104 = vmatprep.subr.bf16.mxu0 0
    %105 = vmatpush1.bf16.msra.mxu0 0
    %106 = vmatprep.subr.bf16.mxu0 0
    %107 = vmatpush1.bf16.msra.mxu0 0
    %108 = vmatprep.subr.bf16.mxu0 0
    %109 = vmatpush1.bf16.msra.mxu0 0
    %110 = vmatprep.mubr.bf16.mxu0 0
    %111 = vmatmul.mubr.bf16.gmra.mrb[0].mxu0 %v69
    %v112 = vpop.f32.mrb[0].mxu0
    %v113 = vadd.f32 0.0, %v112
    %v114 = vpop.f32.mrb[0].mxu0
    %v115 = vpop.f32.mrb[0].mxu0
    %v116 = vadd.f32 0.0, %v115
    %v117 = vpop.f32.mrb[0].mxu0
    %118 = vmatprep.mubr.bf16.mxu0 0
    %119 = vmatmul.mubr.bf16.gmra.mrb[0].mxu0 %v72
    %v120 = vpop.f32.mrb[0].mxu0
    %v121 = vadd.f32 0.0, %v120
    %v122 = vpop.f32.mrb[0].mxu0
    %v123 = vpop.f32.mrb[0].mxu0
    %v124 = vpop.f32.mrb[0].mxu0
    %125 = vdwg.mxu0
    %v126 = vpack.c.bf16 %v116, %v113
    %v127 = vpack.c.bf16 %v121, %v121
    %v128 = vld [vmem:[%s3] sm:$0x1]
    %v130 = vlaneseq
    %v131 = vshrl.u32 %v130, 7
    %v132 = vsub.s32 0, %v131
    %v133 = vrot.slane %v128, %v132
    %v138 = vunpack.c.l.b16 %v52
    %v139 = vunpack.c.l.b16 %v53
    %v140 = vunpack.c.l.b16 %v54
    %v141 = vpack.c.b16 %v139, %v138
    %v142 = vpack.c.b16 %v140, %v140
    %vm143 = vcmask 195584
    %v145 = vsel %vm143, %v141, 0
    %v148 = vsel %vm143, %v142, 0
    %v151 = vsel %vm74, %v127, 0
    %153 = vmatprep.subr.bf16.mxu0 0
    %154 = vmatpush1.bf16.msra.mxu0 %v126
    %155 = vmatprep.subr.bf16.mxu0 0
    %156 = vmatpush1.bf16.msra.mxu0 %v151
    %157 = vmatprep.subr.bf16.mxu0 0
    %158 = vmatpush1.bf16.msra.mxu0 0
    %159 = vmatprep.subr.bf16.mxu0 0
    %160 = vmatpush1.bf16.msra.mxu0 0
    %161 = vmatprep.subr.bf16.mxu0 0
    %162 = vmatpush1.bf16.msra.mxu0 0
    %163 = vmatprep.subr.bf16.mxu0 0
    %164 = vmatpush1.bf16.msra.mxu0 0
    %165 = vmatprep.subr.bf16.mxu0 0
    %166 = vmatpush1.bf16.msra.mxu0 0
    %167 = vmatprep.subr.bf16.mxu0 0
    %168 = vmatpush1.bf16.msra.mxu0 0
    %169 = vmatprep.subr.bf16.mxu0 0
    %170 = vmatpush1.bf16.msra.mxu0 0
    %171 = vmatprep.subr.bf16.mxu0 0
    %172 = vmatpush1.bf16.msra.mxu0 0
    %173 = vmatprep.subr.bf16.mxu0 0
    %174 = vmatpush1.bf16.msra.mxu0 0
    %175 = vmatprep.subr.bf16.mxu0 0
    %176 = vmatpush1.bf16.msra.mxu0 0
    %177 = vmatprep.subr.bf16.mxu0 0
    %178 = vmatpush1.bf16.msra.mxu0 0
    %179 = vmatprep.subr.bf16.mxu0 0
    %180 = vmatpush1.bf16.msra.mxu0 0
    %181 = vmatprep.subr.bf16.mxu0 0
    %182 = vmatpush1.bf16.msra.mxu0 0
    %183 = vmatprep.subr.bf16.mxu0 0
    %184 = vmatpush1.bf16.msra.mxu0 0
    %185 = vmatprep.mubr.bf16.mxu0 0
    %186 = vmatmul.mubr.bf16.gmra.mrb[0].mxu0 %v145
    %v187 = vpop.f32.mrb[0].mxu0
    %v188 = vadd.f32 %v133, %v187
    %v189 = vpop.f32.mrb[0].mxu0
    %v190 = vpop.f32.mrb[0].mxu0
    %v191 = vadd.f32 %v133, %v190
    %v192 = vpop.f32.mrb[0].mxu0
    %193 = vmatprep.mubr.bf16.mxu0 0
    %194 = vmatmul.mubr.bf16.gmra.mrb[0].mxu0 %v148
    %v195 = vpop.f32.mrb[0].mxu0
    %v196 = vadd.f32 %v133, %v195
    %v197 = vpop.f32.mrb[0].mxu0
    %v198 = vpop.f32.mrb[0].mxu0
    %v199 = vpop.f32.mrb[0].mxu0
    %200 = vdwg.mxu0
    %v201 = vmax.f32 %v188, 0.0
    %v202 = vmax.f32 %v191, 0.0
    %v203 = vmax.f32 %v196, 0.0
    %v204 = vpack.c.bf16 %v202, %v201
    %v205 = vpack.c.bf16 %v203, %v203
    %v206 = vld [vmem:[%s4] sm:$0xf]
    %v207 = vld [vmem:[%s4 + $0x4] sm:$0xf]
    %v208 = vld [vmem:[%s4 + $0x8] sm:$0xf]
    %v209 = vld [vmem:[%s4 + $0xc] sm:$0xf]
    %v214 = vunpack.c.l.b16 %v206
    %v215 = vunpack.c.l.b16 %v207
    %v216 = vunpack.c.l.b16 %v208
    %v217 = vunpack.c.l.b16 %v209
    %v218 = vpack.c.b16 %v215, %v214
    %v219 = vpack.c.b16 %v217, %v216
    %vm222 = vcmask 261120
    %v224 = vsel %vm222, %v204, 0
    %v227 = vsel %vm222, %v205, 0
    %229 = vmatprep.subr.bf16.mxu0 0
    %230 = vmatpush1.bf16.msra.mxu0 %v218
    %231 = vmatprep.subr.bf16.mxu0 0
    %232 = vmatpush1.bf16.msra.mxu0 %v219
    %233 = vmatprep.subr.bf16.mxu0 0
    %234 = vmatpush1.bf16.msra.mxu0 0
    %235 = vmatprep.subr.bf16.mxu0 0
    %236 = vmatpush1.bf16.msra.mxu0 0
    %237 = vmatprep.subr.bf16.mxu0 0
    %238 = vmatpush1.bf16.msra.mxu0 0
    %239 = vmatprep.subr.bf16.mxu0 0
    %240 = vmatpush1.bf16.msra.mxu0 0
    %241 = vmatprep.subr.bf16.mxu0 0
    %242 = vmatpush1.bf16.msra.mxu0 0
    %243 = vmatprep.subr.bf16.mxu0 0
    %244 = vmatpush1.bf16.msra.mxu0 0
    %245 = vmatprep.subr.bf16.mxu0 0
    %246 = vmatpush1.bf16.msra.mxu0 0
    %247 = vmatprep.subr.bf16.mxu0 0
    %248 = vmatpush1.bf16.msra.mxu0 0
    %249 = vmatprep.subr.bf16.mxu0 0
    %250 = vmatpush1.bf16.msra.mxu0 0
    %251 = vmatprep.subr.bf16.mxu0 0
    %252 = vmatpush1.bf16.msra.mxu0 0
    %253 = vmatprep.subr.bf16.mxu0 0
    %254 = vmatpush1.bf16.msra.mxu0 0
    %255 = vmatprep.subr.bf16.mxu0 0
    %256 = vmatpush1.bf16.msra.mxu0 0
    %257 = vmatprep.subr.bf16.mxu0 0
    %258 = vmatpush1.bf16.msra.mxu0 0
    %259 = vmatprep.subr.bf16.mxu0 0
    %260 = vmatpush1.bf16.msra.mxu0 0
    %261 = vmatprep.mubr.bf16.mxu0 0
    %262 = vmatmul.mubr.bf16.gmra.mrb[0].mxu0 %v224
    %v263 = vpop.f32.mrb[0].mxu0
    %v264 = vadd.f32 0.0, %v263
    %v265 = vpop.f32.mrb[0].mxu0
    %v266 = vpop.f32.mrb[0].mxu0
    %v267 = vadd.f32 0.0, %v266
    %v268 = vpop.f32.mrb[0].mxu0
    %269 = vmatprep.mubr.bf16.mxu0 0
    %270 = vmatmul.mubr.bf16.gmra.mrb[0].mxu0 %v227
    %v271 = vpop.f32.mrb[0].mxu0
    %v272 = vadd.f32 0.0, %v271
    %v273 = vpop.f32.mrb[0].mxu0
    %v274 = vpop.f32.mrb[0].mxu0
    %v275 = vpop.f32.mrb[0].mxu0
    %276 = vdwg.mxu0
    %v277 = vpack.c.bf16 %v267, %v264
    %v278 = vpack.c.bf16 %v272, %v272
    %v279 = vld [vmem:[%s5] sm:$0x1]
    %v281 = vlaneseq
    %v282 = vshrl.u32 %v281, 7
    %v283 = vsub.s32 0, %v282
    %v284 = vrot.slane %v279, %v283
    %v287 = vsel %vm74, %v278, 0
    %289 = vmatprep.subr.bf16.mxu0 0
    %290 = vmatpush1.bf16.msra.mxu0 %v277
    %291 = vmatprep.subr.bf16.mxu0 0
    %292 = vmatpush1.bf16.msra.mxu0 %v287
    %293 = vmatprep.subr.bf16.mxu0 0
    %294 = vmatpush1.bf16.msra.mxu0 0
    %295 = vmatprep.subr.bf16.mxu0 0
    %296 = vmatpush1.bf16.msra.mxu0 0
    %297 = vmatprep.subr.bf16.mxu0 0
    %298 = vmatpush1.bf16.msra.mxu0 0
    %299 = vmatprep.subr.bf16.mxu0 0
    %300 = vmatpush1.bf16.msra.mxu0 0
    %301 = vmatprep.subr.bf16.mxu0 0
    %302 = vmatpush1.bf16.msra.mxu0 0
    %303 = vmatprep.subr.bf16.mxu0 0
    %304 = vmatpush1.bf16.msra.mxu0 0
    %305 = vmatprep.subr.bf16.mxu0 0
    %306 = vmatpush1.bf16.msra.mxu0 0
    %307 = vmatprep.subr.bf16.mxu0 0
    %308 = vmatpush1.bf16.msra.mxu0 0
    %309 = vmatprep.subr.bf16.mxu0 0
    %310 = vmatpush1.bf16.msra.mxu0 0
    %311 = vmatprep.subr.bf16.mxu0 0
    %312 = vmatpush1.bf16.msra.mxu0 0
    %313 = vmatprep.subr.bf16.mxu0 0
    %314 = vmatpush1.bf16.msra.mxu0 0
    %315 = vmatprep.subr.bf16.mxu0 0
    %316 = vmatpush1.bf16.msra.mxu0 0
    %317 = vmatprep.subr.bf16.mxu0 0
    %318 = vmatpush1.bf16.msra.mxu0 0
    %319 = vmatprep.subr.bf16.mxu0 0
    %320 = vmatpush1.bf16.msra.mxu0 0
    %321 = vmatprep.mubr.bf16.mxu0 0
    %322 = vmatmul.mubr.bf16.gmra.mrb[0].mxu0 %v145
    %v323 = vpop.f32.mrb[0].mxu0
    %v324 = vadd.f32 %v284, %v323
    %v325 = vpop.f32.mrb[0].mxu0
    %v326 = vpop.f32.mrb[0].mxu0
    %v327 = vadd.f32 %v284, %v326
    %v328 = vpop.f32.mrb[0].mxu0
    %329 = vmatprep.mubr.bf16.mxu0 0
    %330 = vmatmul.mubr.bf16.gmra.mrb[0].mxu0 %v148
    %v331 = vpop.f32.mrb[0].mxu0
    %v332 = vadd.f32 %v284, %v331
    %v333 = vpop.f32.mrb[0].mxu0
    %v334 = vpop.f32.mrb[0].mxu0
    %v335 = vpop.f32.mrb[0].mxu0
    %336 = vdwg.mxu0
    %v337 = vpack.c.bf16 %v327, %v324
    %v338 = vpack.c.bf16 %v332, %v332
    %v339 = vld [vmem:[%s6] sm:$0xf]
    %v340 = vld [vmem:[%s6 + $0x4] sm:$0xf]
    %v343 = vunpack.c.l.b16 %v339
    %v344 = vunpack.c.l.b16 %v340
    %v345 = vpack.c.b16 %v344, %v343
    %v347 = vsel %vm143, %v345, 0
    %v350 = vsel %vm74, %v338, 0
    %352 = vmatprep.subr.bf16.mxu0 0
    %353 = vmatpush1.bf16.msra.mxu0 %v337
    %354 = vmatprep.subr.bf16.mxu0 0
    %355 = vmatpush1.bf16.msra.mxu0 %v350
    %356 = vmatprep.subr.bf16.mxu0 0
    %357 = vmatpush1.bf16.msra.mxu0 0
    %358 = vmatprep.subr.bf16.mxu0 0
    %359 = vmatpush1.bf16.msra.mxu0 0
    %360 = vmatprep.subr.bf16.mxu0 0
    %361 = vmatpush1.bf16.msra.mxu0 0
    %362 = vmatprep.subr.bf16.mxu0 0
    %363 = vmatpush1.bf16.msra.mxu0 0
    %364 = vmatprep.subr.bf16.mxu0 0
    %365 = vmatpush1.bf16.msra.mxu0 0
    %366 = vmatprep.subr.bf16.mxu0 0
    %367 = vmatpush1.bf16.msra.mxu0 0
    %368 = vmatprep.subr.bf16.mxu0 0
    %369 = vmatpush1.bf16.msra.mxu0 0
    %370 = vmatprep.subr.bf16.mxu0 0
    %371 = vmatpush1.bf16.msra.mxu0 0
    %372 = vmatprep.subr.bf16.mxu0 0
    %373 = vmatpush1.bf16.msra.mxu0 0
    %374 = vmatprep.subr.bf16.mxu0 0
    %375 = vmatpush1.bf16.msra.mxu0 0
    %376 = vmatprep.subr.bf16.mxu0 0
    %377 = vmatpush1.bf16.msra.mxu0 0
    %378 = vmatprep.subr.bf16.mxu0 0
    %379 = vmatpush1.bf16.msra.mxu0 0
    %380 = vmatprep.subr.bf16.mxu0 0
    %381 = vmatpush1.bf16.msra.mxu0 0
    %382 = vmatprep.subr.bf16.mxu0 0
    %383 = vmatpush1.bf16.msra.mxu0 0
    %384 = vmatprep.mubr.bf16.mxu0 0
    %385 = vmatmul.mubr.bf16.gmra.mrb[0].mxu0 %v347
    %v386 = vpop.f32.mrb[0].mxu0
    %v387 = vadd.f32 0.0, %v386
    %v388 = vpop.f32.mrb[0].mxu0
    %v389 = vpop.f32.mrb[0].mxu0
    %v390 = vadd.f32 0.0, %v389
    %v391 = vpop.f32.mrb[0].mxu0
    %392 = vdwg.mxu0
    %v393 = vpack.c.bf16 %v390, %v387
    %v394 = vld [vmem:[%s7] sm:$0xf]
    %v395 = vld [vmem:[%s7 + $0x4] sm:$0xf]
    %v398 = vunpack.c.l.b16 %v394
    %v399 = vunpack.c.l.b16 %v395
    %v400 = vpack.c.b16 %v399, %v398
    %vm402 = vcmask 130048
    %v404 = vsel %vm402, %v393, 0
    %406 = vmatprep.subr.bf16.mxu0 0
    %407 = vmatpush1.bf16.msra.mxu0 %v400
    %408 = vmatprep.subr.bf16.mxu0 0
    %409 = vmatpush1.bf16.msra.mxu0 0
    %410 = vmatprep.subr.bf16.mxu0 0
    %411 = vmatpush1.bf16.msra.mxu0 0
    %412 = vmatprep.subr.bf16.mxu0 0
    %413 = vmatpush1.bf16.msra.mxu0 0
    %414 = vmatprep.subr.bf16.mxu0 0
    %415 = vmatpush1.bf16.msra.mxu0 0
    %416 = vmatprep.subr.bf16.mxu0 0
    %417 = vmatpush1.bf16.msra.mxu0 0
    %418 = vmatprep.subr.bf16.mxu0 0
    %419 = vmatpush1.bf16.msra.mxu0 0
    %420 = vmatprep.subr.bf16.mxu0 0
    %421 = vmatpush1.bf16.msra.mxu0 0
    %422 = vmatprep.subr.bf16.mxu0 0
    %423 = vmatpush1.bf16.msra.mxu0 0
    %424 = vmatprep.subr.bf16.mxu0 0
    %425 = vmatpush1.bf16.msra.mxu0 0
    %426 = vmatprep.subr.bf16.mxu0 0
    %427 = vmatpush1.bf16.msra.mxu0 0
    %428 = vmatprep.subr.bf16.mxu0 0
    %429 = vmatpush1.bf16.msra.mxu0 0
    %430 = vmatprep.subr.bf16.mxu0 0
    %431 = vmatpush1.bf16.msra.mxu0 0
    %432 = vmatprep.subr.bf16.mxu0 0
    %433 = vmatpush1.bf16.msra.mxu0 0
    %434 = vmatprep.subr.bf16.mxu0 0
    %435 = vmatpush1.bf16.msra.mxu0 0
    %436 = vmatprep.subr.bf16.mxu0 0
    %437 = vmatpush1.bf16.msra.mxu0 0
    %438 = vmatprep.mubr.bf16.mxu0 0
    %439 = vmatmul.mubr.bf16.gmra.mrb[0].mxu0 %v404
    %v440 = vpop.f32.mrb[0].mxu0
    %v441 = vadd.f32 0.0, %v440
    %v442 = vpop.f32.mrb[0].mxu0
    %v443 = vpop.f32.mrb[0].mxu0
    %v444 = vadd.f32 0.0, %v443
    %v445 = vpop.f32.mrb[0].mxu0
    %446 = vdwg.mxu0
    %v447 = vld [vmem:[%s8] sm:$0xf]
    %v448 = vld [vmem:[%s8 + $0x4] sm:$0xf]
    %v449 = vld [vmem:[%s9] sm:$0xf]
    %v450 = vld [vmem:[%s9 + $0x4] sm:$0x3]
    %v453 = vunpack.c.l.b16 %v447
    %v454 = vunpack.c.l.b16 %v448
    %v455 = vpack.c.b16 %v454, %v453
    %v458 = vunpack.c.l.b16 %v449
    %v459 = vunpack.c.l.b16 %v450
    %v460 = vpack.c.b16 %v459, %v458
    %vm461 = vcmask 97280
    %v463 = vsel %vm461, %v455, 0
    %vm465 = vcmask 1045504
    %v467 = vsel %vm465, %v460, 0
    %469 = vmatprep.subr.bf16.mxu0 0
    %470 = vmatpush1.bf16.msra.mxu0 %v467
    %471 = vmatprep.subr.bf16.mxu0 0
    %472 = vmatpush1.bf16.msra.mxu0 0
    %473 = vmatprep.subr.bf16.mxu0 0
    %474 = vmatpush1.bf16.msra.mxu0 0
    %475 = vmatprep.subr.bf16.mxu0 0
    %476 = vmatpush1.bf16.msra.mxu0 0
    %477 = vmatprep.subr.bf16.mxu0 0
    %478 = vmatpush1.bf16.msra.mxu0 0
    %479 = vmatprep.subr.bf16.mxu0 0
    %480 = vmatpush1.bf16.msra.mxu0 0
    %481 = vmatprep.subr.bf16.mxu0 0
    %482 = vmatpush1.bf16.msra.mxu0 0
    %483 = vmatprep.subr.bf16.mxu0 0
    %484 = vmatpush1.bf16.msra.mxu0 0
    %485 = vmatprep.subr.bf16.mxu0 0
    %486 = vmatpush1.bf16.msra.mxu0 0
    %487 = vmatprep.subr.bf16.mxu0 0
    %488 = vmatpush1.bf16.msra.mxu0 0
    %489 = vmatprep.subr.bf16.mxu0 0
    %490 = vmatpush1.bf16.msra.mxu0 0
    %491 = vmatprep.subr.bf16.mxu0 0
    %492 = vmatpush1.bf16.msra.mxu0 0
    %493 = vmatprep.subr.bf16.mxu0 0
    %494 = vmatpush1.bf16.msra.mxu0 0
    %495 = vmatprep.subr.bf16.mxu0 0
    %496 = vmatpush1.bf16.msra.mxu0 0
    %497 = vmatprep.subr.bf16.mxu0 0
    %498 = vmatpush1.bf16.msra.mxu0 0
    %499 = vmatprep.subr.bf16.mxu0 0
    %500 = vmatpush1.bf16.msra.mxu0 0
    %501 = vmatprep.mubr.bf16.mxu0 0
    %502 = vmatmul.mubr.bf16.gmra.mrb[0].mxu0 %v463
    %v503 = vpop.f32.mrb[0].mxu0
    %v504 = vadd.f32 0.0, %v503
    %v505 = vpop.f32.mrb[0].mxu0
    %v506 = vpop.f32.mrb[0].mxu0
    %v507 = vadd.f32 0.0, %v506
    %v508 = vpop.f32.mrb[0].mxu0
    %509 = vdwg.mxu0
    %512 = vrot.lane.b32.xlu0 %v441, 48
    %v513 = vpop.permute.xlu0 %512
    %514 = vrot.lane.b32.xlu0 %v444, 48
    %v515 = vpop.permute.xlu0 %514
    %vm518 = vcmask 392192
    %v519 = vsel %vm518, %v504, %v513
    %v520 = vsel %vm518, %v507, %v515
    %v521 = vpack.c.bf16 %v520, %v519
    %v522 = vld [vmem:[%s10] sm:$0xf]
    %v523 = vld [vmem:[%s10 + $0x4] sm:$0xf]
    %v524 = vld [vmem:[%s10 + $0x8] sm:$0xf]
    %v525 = vld [vmem:[%s10 + $0xc] sm:$0xf]
    %v526 = vld [vmem:[%s10 + $0x10] sm:$0xf]
    %v527 = vld [vmem:[%s10 + $0x14] sm:$0xf]
    %v534 = vunpack.c.l.b16 %v522
    %v535 = vunpack.c.l.b16 %v523
    %v536 = vunpack.c.l.b16 %v524
    %v537 = vunpack.c.l.b16 %v525
    %v538 = vunpack.c.l.b16 %v526
    %v539 = vunpack.c.l.b16 %v527
    %v540 = vpack.c.b16 %v535, %v534
    %v541 = vpack.c.b16 %v537, %v536
    %v542 = vpack.c.b16 %v539, %v538
    %v544 = vsel %vm402, %v540, 0
    %v547 = vsel %vm402, %v541, 0
    %v550 = vsel %vm402, %v542, 0
    %552 = vmatprep.subr.bf16.mxu0 0
    %553 = vmatpush1.bf16.msra.mxu0 %v521
    %554 = vmatprep.subr.bf16.mxu0 0
    %555 = vmatpush1.bf16.msra.mxu0 0
    %556 = vmatprep.subr.bf16.mxu0 0
    %557 = vmatpush1.bf16.msra.mxu0 0
    %558 = vmatprep.subr.bf16.mxu0 0
    %559 = vmatpush1.bf16.msra.mxu0 0
    %560 = vmatprep.subr.bf16.mxu0 0
    %561 = vmatpush1.bf16.msra.mxu0 0
    %562 = vmatprep.subr.bf16.mxu0 0
    %563 = vmatpush1.bf16.msra.mxu0 0
    %564 = vmatprep.subr.bf16.mxu0 0
    %565 = vmatpush1.bf16.msra.mxu0 0
    %566 = vmatprep.subr.bf16.mxu0 0
    %567 = vmatpush1.bf16.msra.mxu0 0
    %568 = vmatprep.subr.bf16.mxu0 0
    %569 = vmatpush1.bf16.msra.mxu0 0
    %570 = vmatprep.subr.bf16.mxu0 0
    %571 = vmatpush1.bf16.msra.mxu0 0
    %572 = vmatprep.subr.bf16.mxu0 0
    %573 = vmatpush1.bf16.msra.mxu0 0
    %574 = vmatprep.subr.bf16.mxu0 0
    %575 = vmatpush1.bf16.msra.mxu0 0
    %576 = vmatprep.subr.bf16.mxu0 0
    %577 = vmatpush1.bf16.msra.mxu0 0
    %578 = vmatprep.subr.bf16.mxu0 0
    %579 = vmatpush1.bf16.msra.mxu0 0
    %580 = vmatprep.subr.bf16.mxu0 0
    %581 = vmatpush1.bf16.msra.mxu0 0
    %582 = vmatprep.subr.bf16.mxu0 0
    %583 = vmatpush1.bf16.msra.mxu0 0
    %584 = vmatprep.mubr.bf16.mxu0 0
    %585 = vmatmul.mubr.bf16.gmra.mrb[0].mxu0 %v544
    %v586 = vpop.f32.mrb[0].mxu0
    %v587 = vadd.f32 0.0, %v586
    %v588 = vpop.f32.mrb[0].mxu0
    %v589 = vpop.f32.mrb[0].mxu0
    %v590 = vadd.f32 0.0, %v589
    %v591 = vpop.f32.mrb[0].mxu0
    %592 = vmatprep.mubr.bf16.mxu0 0
    %593 = vmatmul.mubr.bf16.gmra.mrb[0].mxu0 %v547
    %v594 = vpop.f32.mrb[0].mxu0
    %v595 = vadd.f32 0.0, %v594
    %v596 = vpop.f32.mrb[0].mxu0
    %v597 = vpop.f32.mrb[0].mxu0
    %v598 = vadd.f32 0.0, %v597
    %v599 = vpop.f32.mrb[0].mxu0
    %600 = vmatprep.mubr.bf16.mxu0 0
    %601 = vmatmul.mubr.bf16.gmra.mrb[0].mxu0 %v550
    %v602 = vpop.f32.mrb[0].mxu0
    %v603 = vadd.f32 0.0, %v602
    %v604 = vpop.f32.mrb[0].mxu0
    %v605 = vpop.f32.mrb[0].mxu0
    %v606 = vadd.f32 0.0, %v605
    %v607 = vpop.f32.mrb[0].mxu0
    %608 = vdwg.mxu0
    %611 = vrot.lane.b32.xlu0 %v595, 64
    %v612 = vpop.permute.xlu0 %611
    %613 = vrot.lane.b32.xlu0 %v598, 64
    %v614 = vpop.permute.xlu0 %613
    %vm617 = vcmask 523264
    %v618 = vsel %vm617, %v587, %v612
    %v619 = vsel %vm617, %v590, %v614
    %v620 = vpack.c.bf16 %v619, %v618
    %v621 = vpack.c.bf16 %v606, %v603
    %v622 = vld [vmem:[%s12] sm:$0xf]
    %v623 = vld [vmem:[%s12 + $0x4] sm:$0xf]
    %v624 = vld [vmem:[%s12 + $0x8] sm:$0xf]
    %v625 = vld [vmem:[%s12 + $0xc] sm:$0xf]
    %v626 = vld [vmem:[%s12 + $0x10] sm:$0xf]
    %v627 = vld [vmem:[%s12 + $0x14] sm:$0xf]
    %v628 = vld [vmem:[%s12 + $0x18] sm:$0xf]
    %v629 = vld [vmem:[%s12 + $0x1c] sm:$0xf]
    %v630 = vld [vmem:[%s12 + $0x20] sm:$0xf]
    %v631 = vld [vmem:[%s12 + $0x24] sm:$0xf]
    %v632 = vld [vmem:[%s12 + $0x28] sm:$0xf]
    %v633 = vld [vmem:[%s12 + $0x2c] sm:$0xf]
    %v634 = vld [vmem:[%s12 + $0x30] sm:$0xf]
    %v635 = vld [vmem:[%s12 + $0x34] sm:$0xf]
    %v636 = vld [vmem:[%s12 + $0x38] sm:$0xf]
    %v637 = vld [vmem:[%s12 + $0x3c] sm:$0xf]
    %v638 = vld [vmem:[%s12 + $0x40] sm:$0xf]
    %v639 = vld [vmem:[%s12 + $0x44] sm:$0xf]
    %v640 = vld [vmem:[%s12 + $0x48] sm:$0xf]
    %v641 = vld [vmem:[%s12 + $0x4c] sm:$0xf]
    %v642 = vld [vmem:[%s12 + $0x50] sm:$0xf]
    %v643 = vld [vmem:[%s12 + $0x54] sm:$0xf]
    %v644 = vld [vmem:[%s12 + $0x58] sm:$0xf]
    %v645 = vld [vmem:[%s12 + $0x5c] sm:$0xf]
    %v646 = vld [vmem:[%s11] sm:$0xf]
    %v647 = vld [vmem:[%s11 + $0x4] sm:$0xf]
    %v648 = vld [vmem:[%s11 + $0x8] sm:$0xf]
    %v649 = vld [vmem:[%s11 + $0xc] sm:$0xf]
    %v650 = vld [vmem:[%s11 + $0x10] sm:$0xf]
    %v651 = vld [vmem:[%s11 + $0x14] sm:$0xf]
    %v652 = vld [vmem:[%s11 + $0x18] sm:$0xf]
    %v653 = vld [vmem:[%s11 + $0x1c] sm:$0xf]
    %v662 = vunpack.c.l.b16 %v646
    %v663 = vunpack.c.l.b16 %v647
    %v664 = vunpack.c.l.b16 %v648
    %v665 = vunpack.c.l.b16 %v649
    %v666 = vunpack.c.l.b16 %v650
    %v667 = vunpack.c.l.b16 %v651
    %v668 = vunpack.c.l.b16 %v652
    %v669 = vunpack.c.l.b16 %v653
    %v670 = vpack.c.b16 %v663, %v662
    %v671 = vpack.c.b16 %v665, %v664
    %v672 = vpack.c.b16 %v667, %v666
    %v673 = vpack.c.b16 %v669, %v668
    %v679 = vsel %vm617, %v521, 0
    %681 = vmatprep.subr.bf16.mxu0 0
    %682 = vmatpush1.bf16.msra.mxu0 %v670
    %683 = vmatprep.subr.bf16.mxu0 0
    %684 = vmatpush1.bf16.msra.mxu0 %v671
    %685 = vmatprep.subr.bf16.mxu0 0
    %686 = vmatpush1.bf16.msra.mxu0 %v672
    %687 = vmatprep.subr.bf16.mxu0 0
    %688 = vmatpush1.bf16.msra.mxu0 %v673
    %689 = vmatprep.subr.bf16.mxu0 0
    %690 = vmatpush1.bf16.msra.mxu0 0
    %691 = vmatprep.subr.bf16.mxu0 0
    %692 = vmatpush1.bf16.msra.mxu0 0
    %693 = vmatprep.subr.bf16.mxu0 0
    %694 = vmatpush1.bf16.msra.mxu0 0
    %695 = vmatprep.subr.bf16.mxu0 0
    %696 = vmatpush1.bf16.msra.mxu0 0
    %697 = vmatprep.subr.bf16.mxu0 0
    %698 = vmatpush1.bf16.msra.mxu0 0
    %699 = vmatprep.subr.bf16.mxu0 0
    %700 = vmatpush1.bf16.msra.mxu0 0
    %701 = vmatprep.subr.bf16.mxu0 0
    %702 = vmatpush1.bf16.msra.mxu0 0
    %703 = vmatprep.subr.bf16.mxu0 0
    %704 = vmatpush1.bf16.msra.mxu0 0
    %705 = vmatprep.subr.bf16.mxu0 0
    %706 = vmatpush1.bf16.msra.mxu0 0
    %707 = vmatprep.subr.bf16.mxu0 0
    %708 = vmatpush1.bf16.msra.mxu0 0
    %709 = vmatprep.subr.bf16.mxu0 0
    %710 = vmatpush1.bf16.msra.mxu0 0
    %711 = vmatprep.subr.bf16.mxu0 0
    %712 = vmatpush1.bf16.msra.mxu0 0
    %713 = vmatprep.mubr.bf16.mxu0 0
    %714 = vmatmul.mubr.bf16.gmra.mrb[0].mxu0 %v679
    %v715 = vpop.f32.mrb[0].mxu0
    %v716 = vadd.f32 0.0, %v715
    %v717 = vpop.f32.mrb[0].mxu0
    %v718 = vpop.f32.mrb[0].mxu0
    %v719 = vadd.f32 0.0, %v718
    %v720 = vpop.f32.mrb[0].mxu0
    %721 = vdwg.mxu0
    %v746 = vunpack.c.l.b16 %v622
    %v747 = vunpack.c.l.b16 %v623
    %v748 = vunpack.c.l.b16 %v624
    %v749 = vunpack.c.l.b16 %v625
    %v750 = vunpack.c.l.b16 %v626
    %v751 = vunpack.c.l.b16 %v627
    %v752 = vunpack.c.l.b16 %v628
    %v753 = vunpack.c.l.b16 %v629
    %v754 = vunpack.c.l.b16 %v630
    %v755 = vunpack.c.l.b16 %v631
    %v756 = vunpack.c.l.b16 %v632
    %v757 = vunpack.c.l.b16 %v633
    %v758 = vunpack.c.l.b16 %v634
    %v759 = vunpack.c.l.b16 %v635
    %v760 = vunpack.c.l.b16 %v636
    %v761 = vunpack.c.l.b16 %v637
    %v762 = vunpack.c.l.b16 %v638
    %v763 = vunpack.c.l.b16 %v639
    %v764 = vunpack.c.l.b16 %v640
    %v765 = vunpack.c.l.b16 %v641
    %v766 = vunpack.c.l.b16 %v642
    %v767 = vunpack.c.l.b16 %v643
    %v768 = vunpack.c.l.b16 %v644
    %v769 = vunpack.c.l.b16 %v645
    %v770 = vpack.c.b16 %v747, %v746
    %v771 = vpack.c.b16 %v749, %v748
    %v772 = vpack.c.b16 %v751, %v750
    %v773 = vpack.c.b16 %v753, %v752
    %v774 = vpack.c.b16 %v755, %v754
    %v775 = vpack.c.b16 %v757, %v756
    %v776 = vpack.c.b16 %v759, %v758
    %v777 = vpack.c.b16 %v761, %v760
    %v778 = vpack.c.b16 %v763, %v762
    %v779 = vpack.c.b16 %v765, %v764
    %v780 = vpack.c.b16 %v767, %v766
    %v781 = vpack.c.b16 %v769, %v768
    %v795 = vsel %vm617, %v621, 0
    %797 = vmatprep.subr.bf16.mxu0 0
    %798 = vmatpush1.bf16.msra.mxu0 %v770
    %799 = vmatprep.subr.bf16.mxu0 0
    %800 = vmatpush1.bf16.msra.mxu0 %v771
    %801 = vmatprep.subr.bf16.mxu0 0
    %802 = vmatpush1.bf16.msra.mxu0 %v772
    %803 = vmatprep.subr.bf16.mxu0 0
    %804 = vmatpush1.bf16.msra.mxu0 %v773
    %805 = vmatprep.subr.bf16.mxu0 0
    %806 = vmatpush1.bf16.msra.mxu0 %v774
    %807 = vmatprep.subr.bf16.mxu0 0
    %808 = vmatpush1.bf16.msra.mxu0 %v775
    %809 = vmatprep.subr.bf16.mxu0 0
    %810 = vmatpush1.bf16.msra.mxu0 %v776
    %811 = vmatprep.subr.bf16.mxu0 0
    %812 = vmatpush1.bf16.msra.mxu0 %v777
    %813 = vmatprep.subr.bf16.mxu0 0
    %814 = vmatpush1.bf16.msra.mxu0 %v778
    %815 = vmatprep.subr.bf16.mxu0 0
    %816 = vmatpush1.bf16.msra.mxu0 %v779
    %817 = vmatprep.subr.bf16.mxu0 0
    %818 = vmatpush1.bf16.msra.mxu0 %v780
    %819 = vmatprep.subr.bf16.mxu0 0
    %820 = vmatpush1.bf16.msra.mxu0 %v781
    %821 = vmatprep.subr.bf16.mxu0 0
    %822 = vmatpush1.bf16.msra.mxu0 0
    %823 = vmatprep.subr.bf16.mxu0 0
    %824 = vmatpush1.bf16.msra.mxu0 0
    %825 = vmatprep.subr.bf16.mxu0 0
    %826 = vmatpush1.bf16.msra.mxu0 0
    %827 = vmatprep.subr.bf16.mxu0 0
    %828 = vmatpush1.bf16.msra.mxu0 0
    %829 = vmatprep.mubr.bf16.mxu0 %v795
    %830 = vmatmul.mubr.bf16.gmra.mrb[0].mxu0 %v620
    %v831 = vpop.f32.mrb[0].mxu0
    %v832 = vadd.f32 %v716, %v831
    %v833 = vpop.f32.mrb[0].mxu0
    %v834 = vpop.f32.mrb[0].mxu0
    %v835 = vadd.f32 %v719, %v834
    %v836 = vpop.f32.mrb[0].mxu0
    %837 = vdwg.mxu0
    %v838 = vmax.f32 %v832, 0.0
    %v839 = vmax.f32 %v835, 0.0
    %v840 = vpack.c.bf16 %v839, %v838
    %841 = vmatprep.subr.bf16.mxu0 0
    %842 = vmatpush1.bf16.msra.mxu0 %v840
    %843 = vmatprep.subr.bf16.mxu0 0
    %844 = vmatpush1.bf16.msra.mxu0 0
    %845 = vmatprep.subr.bf16.mxu0 0
    %846 = vmatpush1.bf16.msra.mxu0 0
    %847 = vmatprep.subr.bf16.mxu0 0
    %848 = vmatpush1.bf16.msra.mxu0 0
    %849 = vmatprep.subr.bf16.mxu0 0
    %850 = vmatpush1.bf16.msra.mxu0 0
    %851 = vmatprep.subr.bf16.mxu0 0
    %852 = vmatpush1.bf16.msra.mxu0 0
    %853 = vmatprep.subr.bf16.mxu0 0
    %854 = vmatpush1.bf16.msra.mxu0 0
    %855 = vmatprep.subr.bf16.mxu0 0
    %856 = vmatpush1.bf16.msra.mxu0 0
    %857 = vmatprep.subr.bf16.mxu0 0
    %858 = vmatpush1.bf16.msra.mxu0 0
    %859 = vmatprep.subr.bf16.mxu0 0
    %860 = vmatpush1.bf16.msra.mxu0 0
    %861 = vmatprep.subr.bf16.mxu0 0
    %862 = vmatpush1.bf16.msra.mxu0 0
    %863 = vmatprep.subr.bf16.mxu0 0
    %864 = vmatpush1.bf16.msra.mxu0 0
    %865 = vmatprep.subr.bf16.mxu0 0
    %866 = vmatpush1.bf16.msra.mxu0 0
    %867 = vmatprep.subr.bf16.mxu0 0
    %868 = vmatpush1.bf16.msra.mxu0 0
    %869 = vmatprep.subr.bf16.mxu0 0
    %870 = vmatpush1.bf16.msra.mxu0 0
    %871 = vmatprep.subr.bf16.mxu0 0
    %872 = vmatpush1.bf16.msra.mxu0 0
    %873 = vmatprep.mubr.bf16.mxu0 0
    %874 = vmatmul.mubr.bf16.gmra.mrb[0].mxu0 %v544
    %v875 = vpop.f32.mrb[0].mxu0
    %v876 = vadd.f32 0.0, %v875
    %v877 = vpop.f32.mrb[0].mxu0
    %v878 = vpop.f32.mrb[0].mxu0
    %v879 = vadd.f32 0.0, %v878
    %v880 = vpop.f32.mrb[0].mxu0
    %881 = vmatprep.mubr.bf16.mxu0 0
    %882 = vmatmul.mubr.bf16.gmra.mrb[0].mxu0 %v547
    %v883 = vpop.f32.mrb[0].mxu0
    %v884 = vadd.f32 0.0, %v883
    %v885 = vpop.f32.mrb[0].mxu0
    %v886 = vpop.f32.mrb[0].mxu0
    %v887 = vadd.f32 0.0, %v886
    %v888 = vpop.f32.mrb[0].mxu0
    %889 = vmatprep.mubr.bf16.mxu0 0
    %890 = vmatmul.mubr.bf16.gmra.mrb[0].mxu0 %v550
    %v891 = vpop.f32.mrb[0].mxu0
    %v892 = vadd.f32 0.0, %v891
    %v893 = vpop.f32.mrb[0].mxu0
    %v894 = vpop.f32.mrb[0].mxu0
    %v895 = vadd.f32 0.0, %v894
    %v896 = vpop.f32.mrb[0].mxu0
    %897 = vdwg.mxu0
    %900 = vrot.lane.b32.xlu0 %v884, 32
    %v901 = vpop.permute.xlu0 %900
    %902 = vrot.lane.b32.xlu0 %v887, 32
    %v903 = vpop.permute.xlu0 %902
    %908 = vrot.lane.b32.xlu0 %v892, 64
    %v909 = vpop.permute.xlu0 %908
    %910 = vrot.lane.b32.xlu0 %v895, 64
    %v911 = vpop.permute.xlu0 %910
    %v914 = vsel %vm222, %v876, %v901
    %v915 = vsel %vm222, %v879, %v903
    %v916 = vsel %vm617, %v914, %v909
    %v917 = vsel %vm617, %v915, %v911
    %v918 = vpack.c.bf16 %v917, %v916
    %v919 = vld [vmem:[%s14] sm:$0xf]
    %v920 = vld [vmem:[%s14 + $0x4] sm:$0xf]
    %v921 = vld [vmem:[%s14 + $0x8] sm:$0xf]
    %v922 = vld [vmem:[%s14 + $0xc] sm:$0xf]
    %v923 = vld [vmem:[%s14 + $0x10] sm:$0xf]
    %v924 = vld [vmem:[%s14 + $0x14] sm:$0xf]
    %v925 = vld [vmem:[%s14 + $0x18] sm:$0xf]
    %v926 = vld [vmem:[%s14 + $0x1c] sm:$0xf]
    %v927 = vld [vmem:[%s14 + $0x20] sm:$0xf]
    %v928 = vld [vmem:[%s14 + $0x24] sm:$0xf]
    %v929 = vld [vmem:[%s14 + $0x28] sm:$0xf]
    %v930 = vld [vmem:[%s14 + $0x2c] sm:$0xf]
    %v931 = vld [vmem:[%s13] sm:$0xf]
    %v932 = vld [vmem:[%s13 + $0x4] sm:$0xf]
    %v933 = vld [vmem:[%s13 + $0x8] sm:$0xf]
    %v934 = vld [vmem:[%s13 + $0xc] sm:$0xf]
    %v939 = vunpack.c.l.b16 %v931
    %v940 = vunpack.c.l.b16 %v932
    %v941 = vunpack.c.l.b16 %v933
    %v942 = vunpack.c.l.b16 %v934
    %v943 = vpack.c.b16 %v940, %v939
    %v944 = vpack.c.b16 %v942, %v941
    %v948 = vsel %vm222, %v840, 0
    %950 = vmatprep.subr.bf16.mxu0 0
    %951 = vmatpush1.bf16.msra.mxu0 %v943
    %952 = vmatprep.subr.bf16.mxu0 0
    %953 = vmatpush1.bf16.msra.mxu0 %v944
    %954 = vmatprep.subr.bf16.mxu0 0
    %955 = vmatpush1.bf16.msra.mxu0 0
    %956 = vmatprep.subr.bf16.mxu0 0
    %957 = vmatpush1.bf16.msra.mxu0 0
    %958 = vmatprep.subr.bf16.mxu0 0
    %959 = vmatpush1.bf16.msra.mxu0 0
    %960 = vmatprep.subr.bf16.mxu0 0
    %961 = vmatpush1.bf16.msra.mxu0 0
    %962 = vmatprep.subr.bf16.mxu0 0
    %963 = vmatpush1.bf16.msra.mxu0 0
    %964 = vmatprep.subr.bf16.mxu0 0
    %965 = vmatpush1.bf16.msra.mxu0 0
    %966 = vmatprep.subr.bf16.mxu0 0
    %967 = vmatpush1.bf16.msra.mxu0 0
    %968 = vmatprep.subr.bf16.mxu0 0
    %969 = vmatpush1.bf16.msra.mxu0 0
    %970 = vmatprep.subr.bf16.mxu0 0
    %971 = vmatpush1.bf16.msra.mxu0 0
    %972 = vmatprep.subr.bf16.mxu0 0
    %973 = vmatpush1.bf16.msra.mxu0 0
    %974 = vmatprep.subr.bf16.mxu0 0
    %975 = vmatpush1.bf16.msra.mxu0 0
    %976 = vmatprep.subr.bf16.mxu0 0
    %977 = vmatpush1.bf16.msra.mxu0 0
    %978 = vmatprep.subr.bf16.mxu0 0
    %979 = vmatpush1.bf16.msra.mxu0 0
    %980 = vmatprep.subr.bf16.mxu0 0
    %981 = vmatpush1.bf16.msra.mxu0 0
    %982 = vmatprep.mubr.bf16.mxu0 0
    %983 = vmatmul.mubr.bf16.gmra.mrb[0].mxu0 %v948
    %v984 = vpop.f32.mrb[0].mxu0
    %v985 = vadd.f32 0.0, %v984
    %v986 = vpop.f32.mrb[0].mxu0
    %v987 = vpop.f32.mrb[0].mxu0
    %v988 = vadd.f32 0.0, %v987
    %v989 = vpop.f32.mrb[0].mxu0
    %990 = vdwg.mxu0
    %v1003 = vunpack.c.l.b16 %v919
    %v1004 = vunpack.c.l.b16 %v920
    %v1005 = vunpack.c.l.b16 %v921
    %v1006 = vunpack.c.l.b16 %v922
    %v1007 = vunpack.c.l.b16 %v923
    %v1008 = vunpack.c.l.b16 %v924
    %v1009 = vunpack.c.l.b16 %v925
    %v1010 = vunpack.c.l.b16 %v926
    %v1011 = vunpack.c.l.b16 %v927
    %v1012 = vunpack.c.l.b16 %v928
    %v1013 = vunpack.c.l.b16 %v929
    %v1014 = vunpack.c.l.b16 %v930
    %v1015 = vpack.c.b16 %v1004, %v1003
    %v1016 = vpack.c.b16 %v1006, %v1005
    %v1017 = vpack.c.b16 %v1008, %v1007
    %v1018 = vpack.c.b16 %v1010, %v1009
    %v1019 = vpack.c.b16 %v1012, %v1011
    %v1020 = vpack.c.b16 %v1014, %v1013
    %vm1027 = vcmask 785408
    %v1029 = vsel %vm1027, %v918, 0
    %1031 = vmatprep.subr.bf16.mxu0 0
    %1032 = vmatpush1.bf16.msra.mxu0 %v1015
    %1033 = vmatprep.subr.bf16.mxu0 0
    %1034 = vmatpush1.bf16.msra.mxu0 %v1016
    %1035 = vmatprep.subr.bf16.mxu0 0
    %1036 = vmatpush1.bf16.msra.mxu0 %v1017
    %1037 = vmatprep.subr.bf16.mxu0 0
    %1038 = vmatpush1.bf16.msra.mxu0 %v1018
    %1039 = vmatprep.subr.bf16.mxu0 0
    %1040 = vmatpush1.bf16.msra.mxu0 %v1019
    %1041 = vmatprep.subr.bf16.mxu0 0
    %1042 = vmatpush1.bf16.msra.mxu0 %v1020
    %1043 = vmatprep.subr.bf16.mxu0 0
    %1044 = vmatpush1.bf16.msra.mxu0 0
    %1045 = vmatprep.subr.bf16.mxu0 0
    %1046 = vmatpush1.bf16.msra.mxu0 0
    %1047 = vmatprep.subr.bf16.mxu0 0
    %1048 = vmatpush1.bf16.msra.mxu0 0
    %1049 = vmatprep.subr.bf16.mxu0 0
    %1050 = vmatpush1.bf16.msra.mxu0 0
    %1051 = vmatprep.subr.bf16.mxu0 0
    %1052 = vmatpush1.bf16.msra.mxu0 0
    %1053 = vmatprep.subr.bf16.mxu0 0
    %1054 = vmatpush1.bf16.msra.mxu0 0
    %1055 = vmatprep.subr.bf16.mxu0 0
    %1056 = vmatpush1.bf16.msra.mxu0 0
    %1057 = vmatprep.subr.bf16.mxu0 0
    %1058 = vmatpush1.bf16.msra.mxu0 0
    %1059 = vmatprep.subr.bf16.mxu0 0
    %1060 = vmatpush1.bf16.msra.mxu0 0
    %1061 = vmatprep.subr.bf16.mxu0 0
    %1062 = vmatpush1.bf16.msra.mxu0 0
    %1063 = vmatprep.mubr.bf16.mxu0 0
    %1064 = vmatmul.mubr.bf16.gmra.mrb[0].mxu0 %v1029
    %v1065 = vpop.f32.mrb[0].mxu0
    %v1066 = vadd.f32 %v985, %v1065
    %v1067 = vpop.f32.mrb[0].mxu0
    %v1068 = vpop.f32.mrb[0].mxu0
    %v1069 = vadd.f32 %v988, %v1068
    %v1070 = vpop.f32.mrb[0].mxu0
    %1071 = vdwg.mxu0
    %1072 = vst [vmem:[#allocation2] sm:$0xff] %v1066
    %1073 = vst [vmem:[#allocation2 + $0x8] sm:$0xff] %v1069
    // Predicated region
    $region62: #{tpu_custom_call.1} parent=1 // pred_check
      _
    $region63: #{tpu_custom_call.1} parent=1 // pred_check_branch
      %1075 = sbr.rel (0) target = $region65
    $region64: #{tpu_custom_call.1} parent=1 // pred_region
      %s1077 = ssub.s32 256, 256
      %1078 = vsyncadd [#allocation3], %s1077
      %s1079 = sshll.u32 [#allocation2], 4
      %s1080 = int_to_ptr.vmem [resolvable:$true] %s1079
      %1085 = dma.vmem_to_hbm [thread:$0]  %s1080, 256, %s15, [#allocation3], 128, 128, 8
    $region65: #{tpu_custom_call.1} parent=1 // pred_fallthru
      _
    // Predicated region
    $region66: #{tpu_custom_call.1} parent=1 // pred_check
      _
    $region67: #{tpu_custom_call.1} parent=1 // pred_check_branch
      %1087 = sbr.rel (0) target = $region69
    $region68: #{tpu_custom_call.1} parent=1 // pred_region
      %1088 = dma.done [#allocation3], 256
    $region69: #{tpu_custom_call.1} parent=1 // pred_fallthru
      _
    %1089 = vsyncpa [#allocation3], 1

</llo_original>
